<compile_context>
chip_gen: v7x
topology: tpu7x:2x2x1
jax: 0.10.0
libtpu: 0.0.40
codegen_flags: <defaults>
</compile_context>

<pallas_src>
import functools
import math

import jax
import jax.numpy as jnp
from jax.experimental import pallas as pl
from jax.experimental.pallas import tpu as pltpu

_INV_SQRT2 = 1.0 / math.sqrt(2.0)
_SQRT_2_OVER_PI = math.sqrt(2.0 / math.pi)


def _make_ffn_kernel(approximate):
    def _ffn_kernel(x_ref, w1_ref, b1_ref, w2_ref, b2_ref, o_ref, acc_ref):
        # x_ref : (tm, dim)   native dtype (MXU LHS)
        # w1_ref: (dim, th)   native dtype, streamed over hidden
        # b1_ref: (1, th)
        # w2_ref: (th, dim)   native dtype, streamed over hidden
        # b2_ref: (1, dim)
        # o_ref : (tm, dim)
        # acc_ref: (tm, dim) f32 accumulator, resident across the hidden axis
        k = pl.program_id(1)

        @pl.when(k == 0)
        def _():
            # Seed the accumulator with the output bias: removes a full
            # (tm, dim) VPU add from the epilogue.
            acc_ref[...] = jnp.broadcast_to(
                b2_ref[...].astype(jnp.float32), acc_ref.shape)

        # First linear: native-dtype operands, f32 accumulation on the MXU.
        h = jnp.dot(x_ref[...], w1_ref[...], preferred_element_type=jnp.float32)
        h = h + b1_ref[...].astype(jnp.float32)

        if approximate:
            # tanh-approx GELU: the transcendental goes to the EUP (its own
            # VLIW slot) instead of a long erf polynomial on the 4-wide VALU.
            # NOTE: deviates slightly from torch.nn.GELU's exact erf.
            inner = _SQRT_2_OVER_PI * (h + 0.044715 * (h * h * h))
            h = 0.5 * h * (1.0 + jnp.tanh(inner))
        else:
            # Exact GELU (matches torch.nn.GELU default).
            h = 0.5 * h * (1.0 + jax.lax.erf(h * _INV_SQRT2))

        # Second linear: cast the activation back to the weight dtype so the
        # MXU stays on its fast path; accumulate in f32.
        acc_ref[...] += jnp.dot(h.astype(w2_ref.dtype), w2_ref[...],
                                preferred_element_type=jnp.float32)

        @pl.when(k == pl.num_programs(1) - 1)
        def _():
            o_ref[...] = acc_ref[...].astype(o_ref.dtype)

    return _ffn_kernel


def _round_up(n, m):
    return ((n + m - 1) // m) * m


def _sublane_pack(dtype):
    # Minimum sublane multiple per dtype: 8 (f32), 16 (bf16), 32 (int8/fp8).
    return max(8, 32 // jnp.dtype(dtype).itemsize)


def _vmem_capacity_bytes():
    try:
        return int(pltpu.get_tpu_info().vmem_capacity_bytes)
    except Exception:
        return 64 * 1024 * 1024  # conservative (v7x-sized) fallback


def _tile_vmem_bytes(tm, th, dim, x_bytes, o_bytes, w_bytes):
    return (2 * tm * dim * x_bytes        # x row block (double buffered)
            + 2 * tm * dim * o_bytes      # out row block (double buffered)
            + 2 * dim * th * w_bytes      # w1 slice (double buffered)
            + 2 * th * dim * w_bytes      # w2 slice (double buffered)
            + tm * dim * 4                # f32 accumulator scratch
            + 2 * (th + dim) * 4          # biases
            + (1 << 18))                  # slack for compiler scratch


def _select_tiles(rows, dim, hidden, x_dtype, w_dtype, o_dtype, row_target,
                  budget):
    pack = _sublane_pack(x_dtype)
    x_bytes = jnp.dtype(x_dtype).itemsize
    w_bytes = jnp.dtype(w_dtype).itemsize
    o_bytes = jnp.dtype(o_dtype).itemsize

    # Hidden tile: keep the MXU K/N depth >= 256 (ideally 512/1024) without
    # over-padding narrow hidden dims.  hidden is later zero-padded to a
    # multiple of th.
    hidden_ceil = _round_up(hidden, 128)
    if hidden_ceil < 256:
        th_cands = [hidden_ceil]
    else:
        th_cands = sorted({min(t, hidden_ceil) for t in (1024, 512, 256)},
                          reverse=True)

    tm_cap = min(_round_up(row_target, pack), _round_up(rows, pack))
    tm_cands = [t for t in (1024, 768, 512, 384, 256, 128, 64, 32, 16, 8)
                if t <= tm_cap and t % pack == 0]
    if not tm_cands or tm_cands[0] != tm_cap:
        tm_cands.insert(0, tm_cap)

    # Arithmetic intensity of weight streaming ~= tm FLOPs per weight byte, so
    # prefer the largest row tile, then the deepest hidden tile that fits.
    for tm in tm_cands:
        for th in th_cands:
            if _tile_vmem_bytes(tm, th, dim, x_bytes, o_bytes, w_bytes) <= budget:
                return tm, th
    return tm_cands[-1], th_cands[-1]


@functools.partial(jax.jit, static_argnames=("block_rows", "approximate"))
def feed_forward(x, w1, b1, w2, b2, *, block_rows=None, approximate=False):
    """x: (batch, seq, dim). w1: (dim, hidden), b1: (hidden,), w2: (hidden, dim), b2: (dim,)."""
    batch, seq, dim = x.shape
    hidden = w1.shape[1]
    rows = batch * seq

    x_bytes = jnp.dtype(x.dtype).itemsize
    w_bytes = jnp.dtype(w1.dtype).itemsize
    pack = _sublane_pack(x.dtype)

    vmem_cap = _vmem_capacity_bytes()
    budget = max(24 * 1024 * 1024, vmem_cap - 16 * 1024 * 1024)
    if block_rows is None:
        # 128 MiB-VMEM parts (v5e/v6e) can afford (and benefit from) tm~1024;
        # the 64 MiB part (v7x) only needs ~384-512 to be MXU-bound.
        row_target = 1024 if vmem_cap >= 100 * 1024 * 1024 else 512
    else:
        row_target = block_rows

    tm, th = _select_tiles(rows, dim, hidden, x.dtype, w1.dtype, x.dtype,
                           row_target, budget)

    rows_p = _round_up(rows, tm)
    # Megacore: keep at least 2 row blocks for large problems so the
    # "parallel" row axis can shard across two TensorCores (v7x).
    if rows_p // tm == 1 and rows >= 512:
        tm = _round_up((rows + 1) // 2, pack)
        rows_p = 2 * tm

    hidden_p = _round_up(hidden, th)

    x2d = x.reshape(rows, dim)
    if rows_p != rows:
        x2d = jnp.pad(x2d, ((0, rows_p - rows), (0, 0)))

    if hidden_p != hidden:
        # Zero-pad the hidden axis.  GELU(x@0 + 0) = GELU(0) = 0 and the
        # padded W2 rows are 0, so padded hidden units contribute exactly 0.
        w1 = jnp.pad(w1, ((0, 0), (0, hidden_p - hidden)))
        b1 = jnp.pad(b1, ((0, hidden_p - hidden),))
        w2 = jnp.pad(w2, ((0, hidden_p - hidden), (0, 0)))

    b1_2d = b1.reshape(1, hidden_p)
    b2_2d = b2.reshape(1, dim)

    grid = (rows_p // tm, hidden_p // th)

    cost = pl.CostEstimate(
        flops=4 * rows_p * dim * hidden_p,
        # erf/tanh is evaluated per (row, hidden) element.
        transcendentals=rows_p * hidden_p,
        bytes_accessed=(rows_p * dim * x_bytes                 # x read
                        + rows_p * dim * x_bytes               # out write
                        + grid[0] * 2 * dim * hidden_p * w_bytes  # streamed W1/W2
                        + (hidden_p + dim) * w_bytes),         # biases
    )

    vmem_est = _tile_vmem_bytes(tm, th, dim, x_bytes, x_bytes, w_bytes)
    vmem_limit = int(min(vmem_cap - 2 * 1024 * 1024,
                         max(32 * 1024 * 1024, vmem_est + 16 * 1024 * 1024)))

    out2d = pl.pallas_call(
        _make_ffn_kernel(approximate),
        out_shape=jax.ShapeDtypeStruct((rows_p, dim), x.dtype),
        grid_spec=pltpu.PrefetchScalarGridSpec(
            num_scalar_prefetch=0,
            grid=grid,
            in_specs=[
                pl.BlockSpec((tm, dim), lambda i, k: (i, 0)),   # x row block
                pl.BlockSpec((dim, th), lambda i, k: (0, k)),   # w1 slice (streamed)
                pl.BlockSpec((1, th), lambda i, k: (0, k)),     # b1 slice
                pl.BlockSpec((th, dim), lambda i, k: (k, 0)),   # w2 slice (streamed)
                pl.BlockSpec((1, dim), lambda i, k: (0, 0)),    # b2 (resident)
            ],
            out_specs=pl.BlockSpec((tm, dim), lambda i, k: (i, 0)),
            scratch_shapes=[pltpu.VMEM((tm, dim), jnp.float32)],
        ),
        compiler_params=pltpu.CompilerParams(
            dimension_semantics=("parallel", "arbitrary"),
            vmem_limit_bytes=vmem_limit,
        ),
        cost_estimate=cost,
    )(x2d, w1, b1_2d, w2, b2_2d)

    return out2d[:rows].reshape(batch, seq, dim)


def _init_params(key, dim, hidden_dim, dtype=jnp.float32):
    """Deterministic init mimicking torch.nn.Linear defaults (uniform +/- 1/sqrt(fan_in))."""
    k1, k2, k3, k4 = jax.random.split(key, 4)
    bound1 = 1.0 / math.sqrt(dim)
    bound2 = 1.0 / math.sqrt(hidden_dim)
    # Stored transposed relative to torch (torch weight is (out, in); we use (in, out)).
    w1 = jax.random.uniform(k1, (dim, hidden_dim), dtype, -bound1, bound1)
    b1 = jax.random.uniform(k2, (hidden_dim,), dtype, -bound1, bound1)
    w2 = jax.random.uniform(k3, (hidden_dim, dim), dtype, -bound2, bound2)
    b2 = jax.random.uniform(k4, (dim,), dtype, -bound2, bound2)
    return w1, b1, w2, b2


def _reference(x, w1, b1, w2, b2):
    h = x.astype(jnp.float32) @ w1.astype(jnp.float32) + b1.astype(jnp.float32)
    h = 0.5 * h * (1.0 + jax.lax.erf(h / jnp.sqrt(2.0)))
    return h @ w2.astype(jnp.float32) + b2.astype(jnp.float32)


if __name__ == "__main__":
    key = jax.random.PRNGKey(0)
    kx, kp, kp2 = jax.random.split(key, 3)

    batch, seq, dim, hidden_dim = 2, 8, 32, 128
    x = jax.random.normal(kx, (batch, seq, dim), dtype=jnp.float32)
    w1, b1, w2, b2 = _init_params(kp, dim, hidden_dim)

    # f32 path: exact-GELU parity with torch.nn.GELU.
    out = jax.block_until_ready(feed_forward(x, w1, b1, w2, b2))
    ref = _reference(x, w1, b1, w2, b2)
    assert out.shape == (batch, seq, dim)
    assert jnp.allclose(out, ref, atol=1e-5, rtol=1e-5)

    # Non-128-multiple hidden (exercises the zero-padding path).
    hidden_odd = 200
    w1o, b1o, w2o, b2o = _init_params(kp2, dim, hidden_odd)
    out_odd = jax.block_until_ready(feed_forward(x, w1o, b1o, w2o, b2o))
    ref_odd = _reference(x, w1o, b1o, w2o, b2o)
    assert jnp.allclose(out_odd, ref_odd, atol=1e-5, rtol=1e-5)

    # tanh-approx GELU path (EUP): looser tolerance vs the exact reference.
    out_tanh = jax.block_until_ready(
        feed_forward(x, w1, b1, w2, b2, approximate=True))
    assert jnp.allclose(out_tanh, ref, atol=5e-2, rtol=5e-2)

    # bf16 operand path (MXU fast path, f32 accumulation): looser tolerance.
    xb, w1b, b1b, w2b, b2b = (a.astype(jnp.bfloat16) for a in (x, w1, b1, w2, b2))
    out_bf16 = jax.block_until_ready(feed_forward(xb, w1b, b1b, w2b, b2b))
    ref_bf16 = _reference(xb, w1b, b1b, w2b, b2b)
    assert out_bf16.dtype == jnp.bfloat16
    assert jnp.allclose(out_bf16.astype(jnp.float32), ref_bf16, atol=1e-1, rtol=1e-1)

    print("KERNEL_OK")
</pallas_src>

<mosaic_0001>
module attributes {stable_mosaic.version = 11 : i64} {
  func.func @_ffn_kernel(%arg0: i32, %arg1: i32, %arg2: memref<16x32xf32, #tpu.memory_space<vmem>>, %arg3: memref<32x128xf32, #tpu.memory_space<vmem>>, %arg4: memref<1x128xf32, #tpu.memory_space<vmem>>, %arg5: memref<128x32xf32, #tpu.memory_space<vmem>>, %arg6: memref<1x32xf32, #tpu.memory_space<vmem>>, %arg7: memref<16x32xf32, #tpu.memory_space<vmem>>, %arg8: memref<16x32xf32, #tpu.memory_space<vmem>>) attributes {dimension_semantics = [#tpu.dimension_semantics<parallel>, #tpu.dimension_semantics<arbitrary>], iteration_bounds = array<i64: 1, 1>, scalar_prefetch = 0 : i64, scratch_operands = 1 : i64, tpu.core_type = #tpu.core_type<tc>, window_params = [{transform_indices = @transform_0, window_bounds = array<i64: 16, 32>}, {transform_indices = @transform_1, window_bounds = array<i64: 32, 128>}, {transform_indices = @transform_2, window_bounds = array<i64: 1, 128>}, {transform_indices = @transform_3, window_bounds = array<i64: 128, 32>}, {pipeline_mode = #tpu.pipeline_mode<synchronous>, transform_indices = @transform_4, window_bounds = array<i64: 1, 32>}, {transform_indices = @transform_5, window_bounds = array<i64: 16, 32>}]} {
    %c0_i32 = arith.constant 0 : i32
    %0 = arith.cmpi eq, %arg1, %c0_i32 : i32
    %1 = arith.extui %0 : i1 to i32
    %c0_i32_0 = arith.constant 0 : i32
    %2 = arith.cmpi ne, %1, %c0_i32_0 : i32
    scf.if %2 {
      %c0_18 = arith.constant 0 : index
      %c0_19 = arith.constant 0 : index
      %25 = vector.load %arg6[%c0_18, %c0_19] : memref<1x32xf32, #tpu.memory_space<vmem>>, vector<1x32xf32>
      %26 = vector.shape_cast %25 : vector<1x32xf32> to vector<1x32xf32>
      %27 = vector.broadcast %26 : vector<1x32xf32> to vector<16x32xf32>
      %c0_20 = arith.constant 0 : index
      %c0_21 = arith.constant 0 : index
      %28 = vector.load %arg8[%c0_20, %c0_21] : memref<16x32xf32, #tpu.memory_space<vmem>>, vector<16x32xf32>
      tpu.vector_store %arg8[%c0_20, %c0_21], %27 {strides = array<i32>} : memref<16x32xf32, #tpu.memory_space<vmem>>, vector<16x32xf32>,
    } else {
    }
    %c0 = arith.constant 0 : index
    %c0_1 = arith.constant 0 : index
    %3 = vector.load %arg2[%c0, %c0_1] : memref<16x32xf32, #tpu.memory_space<vmem>>, vector<16x32xf32>
    %c0_2 = arith.constant 0 : index
    %c0_3 = arith.constant 0 : index
    %4 = vector.load %arg3[%c0_2, %c0_3] : memref<32x128xf32, #tpu.memory_space<vmem>>, vector<32x128xf32>
    %cst = arith.constant dense<0.000000e+00> : vector<16x128xf32>
    %5 = tpu.matmul %3, %4, %cst {dimension_numbers = #tpu.dot_dimension_numbers<[1], [0], [0], [1], [0, 0, 1, 1], [], []>} : vector<16x32xf32>, vector<32x128xf32>, vector<16x128xf32> -> vector<16x128xf32>
    %c0_4 = arith.constant 0 : index
    %c0_5 = arith.constant 0 : index
    %6 = vector.load %arg4[%c0_4, %c0_5] : memref<1x128xf32, #tpu.memory_space<vmem>>, vector<1x128xf32>
    %7 = vector.broadcast %6 : vector<1x128xf32> to vector<16x128xf32>
    %8 = arith.addf %5, %7 : vector<16x128xf32>
    %cst_6 = arith.constant 5.000000e-01 : f32
    %9 = vector.broadcast %cst_6 : f32 to vector<16x128xf32>
    %10 = arith.mulf %9, %8 : vector<16x128xf32>
    %cst_7 = arith.constant 0.707106769 : f32
    %11 = vector.broadcast %cst_7 : f32 to vector<16x128xf32>
    %12 = arith.mulf %8, %11 : vector<16x128xf32>
    %13 = math.erf %12 : vector<16x128xf32>
    %cst_8 = arith.constant 1.000000e+00 : f32
    %14 = vector.broadcast %cst_8 : f32 to vector<16x128xf32>
    %15 = arith.addf %14, %13 : vector<16x128xf32>
    %16 = arith.mulf %10, %15 : vector<16x128xf32>
    %c0_9 = arith.constant 0 : index
    %c0_10 = arith.constant 0 : index
    %17 = vector.load %arg8[%c0_9, %c0_10] : memref<16x32xf32, #tpu.memory_space<vmem>>, vector<16x32xf32>
    %c0_11 = arith.constant 0 : index
    %c0_12 = arith.constant 0 : index
    %18 = vector.load %arg5[%c0_11, %c0_12] : memref<128x32xf32, #tpu.memory_space<vmem>>, vector<128x32xf32>
    %cst_13 = arith.constant dense<0.000000e+00> : vector<16x32xf32>
    %19 = tpu.matmul %16, %18, %cst_13 {dimension_numbers = #tpu.dot_dimension_numbers<[1], [0], [0], [1], [0, 0, 1, 1], [], []>} : vector<16x128xf32>, vector<128x32xf32>, vector<16x32xf32> -> vector<16x32xf32>
    %20 = arith.addf %17, %19 : vector<16x32xf32>
    %c0_14 = arith.constant 0 : index
    %c0_15 = arith.constant 0 : index
    %21 = vector.load %arg8[%c0_14, %c0_15] : memref<16x32xf32, #tpu.memory_space<vmem>>, vector<16x32xf32>
    tpu.vector_store %arg8[%c0_14, %c0_15], %20 {strides = array<i32>} : memref<16x32xf32, #tpu.memory_space<vmem>>, vector<16x32xf32>,
    %c0_i32_16 = arith.constant 0 : i32
    %22 = arith.cmpi eq, %arg1, %c0_i32_16 : i32
    %23 = arith.extui %22 : i1 to i32
    %c0_i32_17 = arith.constant 0 : i32
    %24 = arith.cmpi ne, %23, %c0_i32_17 : i32
    scf.if %24 {
      %c0_18 = arith.constant 0 : index
      %c0_19 = arith.constant 0 : index
      %25 = vector.load %arg8[%c0_18, %c0_19] : memref<16x32xf32, #tpu.memory_space<vmem>>, vector<16x32xf32>
      %c0_20 = arith.constant 0 : index
      %c0_21 = arith.constant 0 : index
      %26 = vector.load %arg7[%c0_20, %c0_21] : memref<16x32xf32, #tpu.memory_space<vmem>>, vector<16x32xf32>
      tpu.vector_store %arg7[%c0_20, %c0_21], %25 {strides = array<i32>} : memref<16x32xf32, #tpu.memory_space<vmem>>, vector<16x32xf32>,
    } else {
    }
    return
  }
  func.func @transform_0(%arg0: i32, %arg1: i32) -> (i32, i32) {
    %c0_i32 = arith.constant 0 : i32
    %c0_i32_0 = arith.constant 0 : i32
    return %arg0, %c0_i32 : i32, i32
  }
  func.func @transform_1(%arg0: i32, %arg1: i32) -> (i32, i32) {
    %c0_i32 = arith.constant 0 : i32
    %c0_i32_0 = arith.constant 0 : i32
    return %c0_i32, %arg1 : i32, i32
  }
  func.func @transform_2(%arg0: i32, %arg1: i32) -> (i32, i32) {
    %c0_i32 = arith.constant 0 : i32
    %c0_i32_0 = arith.constant 0 : i32
    return %c0_i32, %arg1 : i32, i32
  }
  func.func @transform_3(%arg0: i32, %arg1: i32) -> (i32, i32) {
    %c0_i32 = arith.constant 0 : i32
    %c0_i32_0 = arith.constant 0 : i32
    return %arg1, %c0_i32 : i32, i32
  }
  func.func @transform_4(%arg0: i32, %arg1: i32) -> (i32, i32) {
    %c0_i32 = arith.constant 0 : i32
    %c0_i32_0 = arith.constant 0 : i32
    %c0_i32_1 = arith.constant 0 : i32
    return %c0_i32, %c0_i32_0 : i32, i32
  }
  func.func @transform_5(%arg0: i32, %arg1: i32) -> (i32, i32) {
    %c0_i32 = arith.constant 0 : i32
    %c0_i32_0 = arith.constant 0 : i32
    return %arg0, %c0_i32 : i32, i32
  }
}

</mosaic_0001>

<llo_original>
// kernel: feed_forward.1
$region0: #{feed_forward.1}
  #allocation0 [shape = 'u32[]', space=smem, size = 0x4, offset = 0x4, fixed_abs, tag = 'smem constant byte address 0x4 - core index']
  #allocation1 [shape = 'u32[144,128]{1,0:T(1,128)}', space=vmem, size = 0x12000, scoped, tag = 'internal scratch']
  #allocation2 [shape = 'f32[16,32]{1,0:T(8,128)}', space=vmem, size = 0x2000, scoped, tag = 'scratch operand']
  %s0 = inlined_call_operand.vmem [shape: f32[16,32], index: 0, kind: input, shape index: {}]
  %s1 = inlined_call_operand.vmem [shape: f32[32,128], index: 1, kind: input, shape index: {}]
  %s2 = inlined_call_operand.vmem [shape: f32[1,128], index: 2, kind: input, shape index: {}]
  %s3 = inlined_call_operand.vmem [shape: f32[128,32], index: 3, kind: input, shape index: {}]
  %s4 = inlined_call_operand.vmem [shape: f32[1,32], index: 4, kind: input, shape index: {}]
  %s5 = inlined_call_operand.hbm [shape: f32[16,32], index: 5, kind: output, shape index: {}]
  %s6 = sld [smem:[#allocation0]]
  $region38: #{feed_forward.1} parent=0
    _
  %s8 = ssub.s32 1, %s6
  %s9 = scalar_select 0, %s8, %s6
  $region1: #{feed_forward.1} parent=0
    #allocation3 [shape = 'u8[8192]{0}', space=vmem, size = 0x2000, scoped, tag = 'output window, operand 0, single buffered']
    #allocation4 [shape = 's32[1]{0}', space=sflag, size = 0x4, scoped, tag = 'scoped memory for feed_forward.1']
    %10 = vsyncpa [#allocation4], 0
    // Predicated region
    $region2: #{feed_forward.1} parent=1 // pred_check
      _
    $region3: #{feed_forward.1} parent=1 // pred_check_branch
      %12 = sbr.rel (0) target = $region5
    $region4: #{feed_forward.1} parent=1 // pred_region
      _
    $region5: #{feed_forward.1} parent=1 // pred_fallthru
      _
    // Predicated region
    $region6: #{feed_forward.1} parent=1 // pred_check
      _
    $region7: #{feed_forward.1} parent=1 // pred_check_branch
      %14 = sbr.rel (0) target = $region9
    $region8: #{feed_forward.1} parent=1 // pred_region
      _
    $region9: #{feed_forward.1} parent=1 // pred_fallthru
      _
    // Predicated region
    $region10: #{feed_forward.1} parent=1 // pred_check
      _
    $region11: #{feed_forward.1} parent=1 // pred_check_branch
      %16 = sbr.rel (0) target = $region13
    $region12: #{feed_forward.1} parent=1 // pred_region
      _
    $region13: #{feed_forward.1} parent=1 // pred_fallthru
      _
    // Predicated region
    $region14: #{feed_forward.1} parent=1 // pred_check
      _
    $region15: #{feed_forward.1} parent=1 // pred_check_branch
      %18 = sbr.rel (0) target = $region17
    $region16: #{feed_forward.1} parent=1 // pred_region
      _
    $region17: #{feed_forward.1} parent=1 // pred_fallthru
      _
    // Predicated region
    $region18: #{feed_forward.1} parent=1 // pred_check
      _
    $region19: #{feed_forward.1} parent=1 // pred_check_branch
      %20 = sbr.rel (0) target = $region21
    $region20: #{feed_forward.1} parent=1 // pred_region
      _
    $region21: #{feed_forward.1} parent=1 // pred_fallthru
      _
    %p21 = scmp.eq.s32.totalorder 0, 0
    // Predicated region
    $region22: #{feed_forward.1} parent=1 // pred_check
      %p22 = pneg %p21
    $region23: #{feed_forward.1} parent=1 // pred_check_branch
      %24 = sbr.rel (%p22) target = $region25
    $region24: #{feed_forward.1} parent=1 // pred_region
      %v25 = vld [vmem:[%s4] sm:$0x1]
      %v27 = vlaneseq
      %v28 = vshrl.u32 %v27, 7
      %v29 = vsub.s32 0, %v28
      %v30 = vrot.slane %v25, %v29
      %vm32 = vcmask 261120
      %33 = vst.msk [vmem:[#allocation2] sm:$0xff] %vm32, %v30
      %34 = vst.msk [vmem:[#allocation2 + $0x8] sm:$0xff] %vm32, %v30
    $region25: #{feed_forward.1} parent=1 // pred_fallthru
      _
    %v35 = vld [vmem:[%s0] sm:$0xff]
    %v36 = vld [vmem:[%s0 + $0x8] sm:$0xff]
    %v37 = vld [vmem:[%s1] sm:$0xff]
    %v38 = vld [vmem:[%s1 + $0x8] sm:$0xff]
    %v39 = vld [vmem:[%s1 + $0x10] sm:$0xff]
    %v40 = vld [vmem:[%s1 + $0x18] sm:$0xff]
    %v41 = vld [vmem:[%s2] sm:$0x1]
    %v43 = vlaneseq
    %v44 = vshrl.u32 %v43, 7
    %v45 = vsub.s32 0, %v44
    %v46 = vrot.slane %v41, %v45
    %vm48 = vcmask 261120
    %v50 = vsel %vm48, %v35, 0
    %v53 = vsel %vm48, %v36, 0
    %55 = vmatprep.subr.mxu0 0.0
    %56 = vmatpush1.msra.mxu0 %v37
    %57 = vmatprep.subr.mxu0 0.0
    %58 = vmatpush1.msra.mxu0 %v38
    %59 = vmatprep.subr.mxu0 0.0
    %60 = vmatpush1.msra.mxu0 %v39
    %61 = vmatprep.subr.mxu0 0.0
    %62 = vmatpush1.msra.mxu0 %v40
    %63 = vmatprep.subr.mxu0 0.0
    %64 = vmatpush1.msra.mxu0 0.0
    %65 = vmatprep.subr.mxu0 0.0
    %66 = vmatpush1.msra.mxu0 0.0
    %67 = vmatprep.subr.mxu0 0.0
    %68 = vmatpush1.msra.mxu0 0.0
    %69 = vmatprep.subr.mxu0 0.0
    %70 = vmatpush1.msra.mxu0 0.0
    %71 = vmatprep.subr.mxu0 0.0
    %72 = vmatpush1.msra.mxu0 0.0
    %73 = vmatprep.subr.mxu0 0.0
    %74 = vmatpush1.msra.mxu0 0.0
    %75 = vmatprep.subr.mxu0 0.0
    %76 = vmatpush1.msra.mxu0 0.0
    %77 = vmatprep.subr.mxu0 0.0
    %78 = vmatpush1.msra.mxu0 0.0
    %79 = vmatprep.subr.mxu0 0.0
    %80 = vmatpush1.msra.mxu0 0.0
    %81 = vmatprep.subr.mxu0 0.0
    %82 = vmatpush1.msra.mxu0 0.0
    %83 = vmatprep.subr.mxu0 0.0
    %84 = vmatpush1.msra.mxu0 0.0
    %85 = vmatprep.subr.mxu0 0.0
    %86 = vmatpush1.msra.mxu0 0.0
    %87 = vmatprep.subr.mxu0 0.0
    %88 = vmatpush1.msra.mxu0 0.0
    %89 = vmatprep.subr.mxu0 0.0
    %90 = vmatpush1.msra.mxu0 0.0
    %91 = vmatprep.subr.mxu0 0.0
    %92 = vmatpush1.msra.mxu0 0.0
    %93 = vmatprep.subr.mxu0 0.0
    %94 = vmatpush1.msra.mxu0 0.0
    %95 = vmatprep.subr.mxu0 0.0
    %96 = vmatpush1.msra.mxu0 0.0
    %97 = vmatprep.subr.mxu0 0.0
    %98 = vmatpush1.msra.mxu0 0.0
    %99 = vmatprep.subr.mxu0 0.0
    %100 = vmatpush1.msra.mxu0 0.0
    %101 = vmatprep.subr.mxu0 0.0
    %102 = vmatpush1.msra.mxu0 0.0
    %103 = vmatprep.subr.mxu0 0.0
    %104 = vmatpush1.msra.mxu0 0.0
    %105 = vmatprep.subr.mxu0 0.0
    %106 = vmatpush1.msra.mxu0 0.0
    %107 = vmatprep.subr.mxu0 0.0
    %108 = vmatpush1.msra.mxu0 0.0
    %109 = vmatprep.subr.mxu0 0.0
    %110 = vmatpush1.msra.mxu0 0.0
    %111 = vmatprep.subr.mxu0 0.0
    %112 = vmatpush1.msra.mxu0 0.0
    %113 = vmatprep.subr.mxu0 0.0
    %114 = vmatpush1.msra.mxu0 0.0
    %115 = vmatprep.subr.mxu0 0.0
    %116 = vmatpush1.msra.mxu0 0.0
    %117 = vmatprep.subr.mxu0 0.0
    %118 = vmatpush1.msra.mxu0 0.0
    %119 = vmatprep.mubr.f32.mxu0 0.0
    %120 = vmatmul.mubr.f32.gmra.mrb[0].mxu0 %v50
    %v121 = vpop.f32.mrb[0].mxu0
    %v122 = vadd.f32 %v46, %v121
    %v123 = vpop.f32.mrb[0].mxu0
    %124 = vmatprep.mubr.f32.mxu0 0.0
    %125 = vmatmul.mubr.f32.gmra.mrb[0].mxu0 %v53
    %v126 = vpop.f32.mrb[0].mxu0
    %v127 = vadd.f32 %v46, %v126
    %v128 = vpop.f32.mrb[0].mxu0
    %129 = vdwg.mxu0
    %v130 = vmul.f32 %v122, 0.5
    %v131 = vmul.f32 %v127, 0.5
    %v132 = vmul.f32 %v122, 0.70710677
    %v133 = vmul.f32 %v127, 0.70710677
    %v134 = verf.f32.pop %v132
    %v135 = verf.f32.pop %v133
    %v136 = vadd.f32 %v134, 1.0
    %v137 = vadd.f32 %v135, 1.0
    %v138 = vmul.f32 %v130, %v136
    %v139 = vmul.f32 %v131, %v137
    %v140 = vld [vmem:[#allocation2] sm:$0xff]
    %v141 = vld [vmem:[#allocation2 + $0x8] sm:$0xff]
    %v142 = vld [vmem:[%s3] sm:$0xff]
    %v143 = vld [vmem:[%s3 + $0x8] sm:$0xff]
    %v144 = vld [vmem:[%s3 + $0x10] sm:$0xff]
    %v145 = vld [vmem:[%s3 + $0x18] sm:$0xff]
    %v146 = vld [vmem:[%s3 + $0x20] sm:$0xff]
    %v147 = vld [vmem:[%s3 + $0x28] sm:$0xff]
    %v148 = vld [vmem:[%s3 + $0x30] sm:$0xff]
    %v149 = vld [vmem:[%s3 + $0x38] sm:$0xff]
    %v150 = vld [vmem:[%s3 + $0x40] sm:$0xff]
    %v151 = vld [vmem:[%s3 + $0x48] sm:$0xff]
    %v152 = vld [vmem:[%s3 + $0x50] sm:$0xff]
    %v153 = vld [vmem:[%s3 + $0x58] sm:$0xff]
    %v154 = vld [vmem:[%s3 + $0x60] sm:$0xff]
    %v155 = vld [vmem:[%s3 + $0x68] sm:$0xff]
    %v156 = vld [vmem:[%s3 + $0x70] sm:$0xff]
    %v157 = vld [vmem:[%s3 + $0x78] sm:$0xff]
    %158 = vmatprep.subr.mxu0 0.0
    %159 = vmatpush1.msra.mxu0 %v142
    %160 = vmatprep.subr.mxu0 0.0
    %161 = vmatpush1.msra.mxu0 %v143
    %162 = vmatprep.subr.mxu0 0.0
    %163 = vmatpush1.msra.mxu0 %v144
    %164 = vmatprep.subr.mxu0 0.0
    %165 = vmatpush1.msra.mxu0 %v145
    %166 = vmatprep.subr.mxu0 0.0
    %167 = vmatpush1.msra.mxu0 %v146
    %168 = vmatprep.subr.mxu0 0.0
    %169 = vmatpush1.msra.mxu0 %v147
    %170 = vmatprep.subr.mxu0 0.0
    %171 = vmatpush1.msra.mxu0 %v148
    %172 = vmatprep.subr.mxu0 0.0
    %173 = vmatpush1.msra.mxu0 %v149
    %174 = vmatprep.subr.mxu0 0.0
    %175 = vmatpush1.msra.mxu0 %v150
    %176 = vmatprep.subr.mxu0 0.0
    %177 = vmatpush1.msra.mxu0 %v151
    %178 = vmatprep.subr.mxu0 0.0
    %179 = vmatpush1.msra.mxu0 %v152
    %180 = vmatprep.subr.mxu0 0.0
    %181 = vmatpush1.msra.mxu0 %v153
    %182 = vmatprep.subr.mxu0 0.0
    %183 = vmatpush1.msra.mxu0 %v154
    %184 = vmatprep.subr.mxu0 0.0
    %185 = vmatpush1.msra.mxu0 %v155
    %186 = vmatprep.subr.mxu0 0.0
    %187 = vmatpush1.msra.mxu0 %v156
    %188 = vmatprep.subr.mxu0 0.0
    %189 = vmatpush1.msra.mxu0 %v157
    %190 = vmatprep.subr.mxu0 0.0
    %191 = vmatpush1.msra.mxu0 0.0
    %192 = vmatprep.subr.mxu0 0.0
    %193 = vmatpush1.msra.mxu0 0.0
    %194 = vmatprep.subr.mxu0 0.0
    %195 = vmatpush1.msra.mxu0 0.0
    %196 = vmatprep.subr.mxu0 0.0
    %197 = vmatpush1.msra.mxu0 0.0
    %198 = vmatprep.subr.mxu0 0.0
    %199 = vmatpush1.msra.mxu0 0.0
    %200 = vmatprep.subr.mxu0 0.0
    %201 = vmatpush1.msra.mxu0 0.0
    %202 = vmatprep.subr.mxu0 0.0
    %203 = vmatpush1.msra.mxu0 0.0
    %204 = vmatprep.subr.mxu0 0.0
    %205 = vmatpush1.msra.mxu0 0.0
    %206 = vmatprep.subr.mxu0 0.0
    %207 = vmatpush1.msra.mxu0 0.0
    %208 = vmatprep.subr.mxu0 0.0
    %209 = vmatpush1.msra.mxu0 0.0
    %210 = vmatprep.subr.mxu0 0.0
    %211 = vmatpush1.msra.mxu0 0.0
    %212 = vmatprep.subr.mxu0 0.0
    %213 = vmatpush1.msra.mxu0 0.0
    %214 = vmatprep.subr.mxu0 0.0
    %215 = vmatpush1.msra.mxu0 0.0
    %216 = vmatprep.subr.mxu0 0.0
    %217 = vmatpush1.msra.mxu0 0.0
    %218 = vmatprep.subr.mxu0 0.0
    %219 = vmatpush1.msra.mxu0 0.0
    %220 = vmatprep.subr.mxu0 0.0
    %221 = vmatpush1.msra.mxu0 0.0
    %222 = vmatprep.mubr.f32.mxu0 0.0
    %223 = vmatmul.mubr.f32.gmra.mrb[0].mxu0 %v138
    %v224 = vpop.f32.mrb[0].mxu0
    %v225 = vadd.f32 0.0, %v224
    %v226 = vpop.f32.mrb[0].mxu0
    %227 = vmatprep.mubr.f32.mxu0 0.0
    %228 = vmatmul.mubr.f32.gmra.mrb[0].mxu0 %v139
    %v229 = vpop.f32.mrb[0].mxu0
    %v230 = vadd.f32 0.0, %v229
    %v231 = vpop.f32.mrb[0].mxu0
    %232 = vdwg.mxu0
    %v233 = vadd.f32 %v140, %v225
    %v234 = vadd.f32 %v141, %v230
    %235 = vst.msk [vmem:[#allocation2] sm:$0xff] %vm48, %v233
    %236 = vst.msk [vmem:[#allocation2 + $0x8] sm:$0xff] %vm48, %v234
    // Predicated region
    $region26: #{feed_forward.1} parent=1 // pred_check
      %p237 = pneg %p21
    $region27: #{feed_forward.1} parent=1 // pred_check_branch
      %239 = sbr.rel (%p237) target = $region29
    $region28: #{feed_forward.1} parent=1 // pred_region
      %v240 = vld [vmem:[#allocation2] sm:$0xff]
      %v241 = vld [vmem:[#allocation2 + $0x8] sm:$0xff]
      %242 = vst.msk [vmem:[#allocation3] sm:$0xff] %vm48, %v240
      %243 = vst.msk [vmem:[#allocation3 + $0x8] sm:$0xff] %vm48, %v241
    $region29: #{feed_forward.1} parent=1 // pred_fallthru
      _
    // Predicated region
    $region30: #{feed_forward.1} parent=1 // pred_check
      _
    $region31: #{feed_forward.1} parent=1 // pred_check_branch
      %245 = sbr.rel (0) target = $region33
    $region32: #{feed_forward.1} parent=1 // pred_region
      %s247 = ssub.s32 256, 256
      %248 = vsyncadd [#allocation4], %s247
      %s249 = sshll.u32 [#allocation3], 4
      %s250 = int_to_ptr.vmem [resolvable:$true] %s249
      %255 = dma.vmem_to_hbm [thread:$0]  %s250, 256, %s5, [#allocation4], 128, 128, 8
    $region33: #{feed_forward.1} parent=1 // pred_fallthru
      _
    // Predicated region
    $region34: #{feed_forward.1} parent=1 // pred_check
      _
    $region35: #{feed_forward.1} parent=1 // pred_check_branch
      %257 = sbr.rel (0) target = $region37
    $region36: #{feed_forward.1} parent=1 // pred_region
      %258 = dma.done [#allocation4], 256
    $region37: #{feed_forward.1} parent=1 // pred_fallthru
      _
    %259 = vsyncpa [#allocation4], 1

</llo_original>
